<compile_context>
chip_gen: v7x
topology: tpu7x:2x2x1
jax: 0.10.0
libtpu: 0.0.40
codegen_flags: <defaults>
</compile_context>

<pallas_src>
import functools

import numpy as np
import jax
import jax.numpy as jnp
from jax.experimental import pallas as pl
from jax.experimental.pallas import tpu as pltpu


def _round_up(x, m):
    return ((x + m - 1) // m) * m


# ----------------------------------------------------------------------------
# Kernel body
# ----------------------------------------------------------------------------
def _kan_kernel(x_ref, cw_ref, o_ref, *, knots, inv_h):
    # x_ref : (TILE_B, in_p)        f32 or bf16
    # cw_ref: (G * in_p, TILE_N)    bf16   (base_weight folded in, zero-padded)
    # o_ref : (TILE_B, TILE_N)      f32
    h = 1.0 / inv_h
    x = x_ref[...].astype(jnp.float32)
    x = jnp.clip(x, -1.0, 1.0)
    # x == 1.0 falls in NO half-open interval in the reference -> push it outside
    # the support of every hat function (single select instead of one per knot).
    x = jnp.where(x < knots[-1], x, knots[-1] + h)
    # Hat basis per knot: relu(1 - |x - g_k| * inv_h); cast to bf16 for the MXU.
    basis = [
        jnp.maximum(0.0, 1.0 - jnp.abs(x - g) * inv_h).astype(jnp.bfloat16)
        for g in knots
    ]
    w = jnp.concatenate(basis, axis=-1)  # (TILE_B, G * in_p), column k*in_p + j
    o_ref[...] = jnp.dot(w, cw_ref[...], preferred_element_type=jnp.float32)


# ----------------------------------------------------------------------------
# Parameter folding (do this ONCE per layer, reuse across forwards)
# ----------------------------------------------------------------------------
def prepare_kan_params(coefficients, base_weight, grid_size, in_p, out_p):
    """Fold base_weight into the spline coefficients, zero-pad, and lay out as
    the (grid_size * in_p, out_p) bf16 matmul RHS."""
    out_f, in_f, g = coefficients.shape
    assert g == grid_size
    assert base_weight.shape == (out_f, in_f)
    assert in_p >= in_f and out_p >= out_f
    cw = coefficients * base_weight[:, :, None]                 # (out, in, G)
    cw = jnp.transpose(cw, (2, 1, 0))                           # (G, in, out)
    # Zero padding along the in axis is what neutralizes padded x features
    # (x=0 activates the middle knot; zero coefficient rows kill it).
    cw = jnp.pad(cw, ((0, 0), (0, in_p - in_f), (0, out_p - out_f)))
    cw = cw.reshape(grid_size * in_p, out_p).astype(jnp.bfloat16)
    assert cw.shape == (grid_size * in_p, out_p)
    return cw


# ----------------------------------------------------------------------------
# VMEM budget / tile selection
# ----------------------------------------------------------------------------
def _vmem_limit_bytes():
    try:
        phys = int(pltpu.get_tpu_info().vmem_capacity_bytes)
    except Exception:
        phys = 64 * 1024 * 1024  # conservative: v7x per-TensorCore VMEM
    # ~96 MiB on v5e/v6e (128 MiB physical), ~54 MiB on v7x (64 MiB physical).
    return min(int(phys * 0.85), 96 * 1024 * 1024)


def _footprint(tile_b, in_p, tile_n, grid_size, x_itemsize):
    """Per-step VMEM footprint: double-buffered x/cw/out + basis temporaries."""
    x_buf = 2 * tile_b * in_p * x_itemsize
    cw_buf = 2 * grid_size * in_p * tile_n * 2          # bf16
    out_buf = 2 * tile_b * tile_n * 4
    basis_tmp = (grid_size + 2) * tile_b * in_p * 4     # f32 hats + bf16 concat
    return x_buf + cw_buf + out_buf + basis_tmp


def _select_tiling(b, in_f, out_f, grid_size, budget, x_itemsize, force_tiled):
    in_p = _round_up(in_f, 128)
    b8 = _round_up(max(b, 1), 8)
    tb_cands = sorted({min(c, b8) for c in (512, 256, 128, 64, 32, 16, 8)},
                      reverse=True)

    # Path A: cw fully resident in VMEM, only the batch axis streams.
    if not force_tiled:
        out_p = _round_up(out_f, 128)
        for tb in tb_cands:
            if _footprint(tb, in_p, out_p, grid_size, x_itemsize) <= budget:
                if tb >= min(b8, 128):
                    return dict(mode="resident", tile_b=tb, tile_n=out_p,
                                in_p=in_p, out_p=out_p)
                break  # resident cw would force tiny batch tiles -> tile instead

    # Path B: tile the out axis (outermost grid axis -> cw slab reuse).
    out_p128 = _round_up(out_f, 128)
    tn_cands = sorted({min(c, out_p128) for c in (512, 256, 128)}, reverse=True)
    best = None
    for tn in tn_cands:
        for tb in tb_cands:
            if _footprint(tb, in_p, tn, grid_size, x_itemsize) <= budget:
                score = (tb * tn, tb)
                if best is None or score > best[0]:
                    best = (score, tb, tn)
                break  # largest feasible tb for this tn already found
    if best is None:
        # TODO(synk): add a K (grid_size*in_p) reduction grid axis with an f32
        # accumulator for extreme fan-in; fall back to minimal lane-dense tiles.
        best = ((0, 0), 8, 128)
    _, tb, tn = best
    out_p = _round_up(out_f, tn)
    return dict(mode="tiled", tile_b=tb, tile_n=tn, in_p=in_p, out_p=out_p)


# ----------------------------------------------------------------------------
# Forward
# ----------------------------------------------------------------------------
def kan_layer_forward(x, coefficients, base_weight, grid_size=5,
                      *, stream_x_bf16=False, force_tiled=False):
    """Pallas forward of KANLayer.

    x:            (B, in_features)        f32
    coefficients: (out, in, grid_size)    f32  -- activations[o*in+j].coefficients
    base_weight:  (out, in)               f32
    returns       (B, out_features)       f32
    """
    b, in_f = x.shape
    out_f, in_f2 = base_weight.shape
    assert in_f2 == in_f
    assert coefficients.shape == (out_f, in_f, grid_size)

    knots = np.linspace(-1.0, 1.0, grid_size).astype(np.float32)
    inv_h = float(grid_size - 1) / 2.0  # uniform knots: 1 / (g[k+1] - g[k])

    vmem_limit = _vmem_limit_bytes()
    budget = int(vmem_limit * 0.85)       # headroom for compiler scratch

    x_dtype = jnp.bfloat16 if stream_x_bf16 else jnp.float32
    x_itemsize = jnp.dtype(x_dtype).itemsize

    cfg = _select_tiling(b, in_f, out_f, grid_size, budget, x_itemsize,
                         force_tiled)
    tile_b, tile_n = cfg["tile_b"], cfg["tile_n"]
    in_p, out_p = cfg["in_p"], cfg["out_p"]
    K = grid_size * in_p

    b_p = _round_up(b, tile_b)
    x_p = jnp.pad(x.astype(jnp.float32),
                  ((0, b_p - b), (0, in_p - in_f))).astype(x_dtype)
    cw = prepare_kan_params(coefficients, base_weight, grid_size, in_p, out_p)

    kernel = functools.partial(
        _kan_kernel, knots=tuple(float(g) for g in knots), inv_h=inv_h)

    cost = pl.CostEstimate(
        flops=2 * b_p * K * out_p,
        transcendentals=0,
        bytes_accessed=b_p * in_p * x_itemsize + K * out_p * 2 + b_p * out_p * 4,
    )

    if cfg["mode"] == "resident":
        # cw lives in VMEM for the whole call (constant index_map); only the
        # batch axis streams -> x read once, basis computed once per batch tile.
        grid = (b_p // tile_b,)
        in_specs = [
            pl.BlockSpec((tile_b, in_p), lambda nb: (nb, 0)),
            pl.BlockSpec((K, out_p), lambda nb: (0, 0)),
        ]
        out_specs = pl.BlockSpec((tile_b, out_p), lambda nb: (nb, 0))
        dims = ("parallel",)
    else:
        # out axis outermost -> each cw out-slab DMA'd once, reused across all
        # batch tiles; both axes parallel so v7x shards out across its 2 TCs.
        grid = (out_p // tile_n, b_p // tile_b)
        in_specs = [
            pl.BlockSpec((tile_b, in_p), lambda no, nb: (nb, 0)),
            pl.BlockSpec((K, tile_n), lambda no, nb: (0, no)),
        ]
        out_specs = pl.BlockSpec((tile_b, tile_n), lambda no, nb: (nb, no))
        dims = ("parallel", "parallel")

    out_padded = pl.pallas_call(
        kernel,
        grid=grid,
        out_shape=jax.ShapeDtypeStruct((b_p, out_p), jnp.float32),
        in_specs=in_specs,
        out_specs=out_specs,
        compiler_params=pltpu.CompilerParams(
            dimension_semantics=dims,
            vmem_limit_bytes=vmem_limit,
        ),
        cost_estimate=cost,
    )(x_p, cw)

    return out_padded[:b, :out_f]


# ----------------------------------------------------------------------------
# Plain-JAX reference (mirror of the PyTorch nested loops) -- verification only
# ----------------------------------------------------------------------------
def _reference(x, coefficients, base_weight, grid_size=5):
    knots = np.linspace(-1.0, 1.0, grid_size).astype(np.float32)
    xc = jnp.clip(x, -1.0, 1.0)  # (B, in)
    out_f, in_f, _ = coefficients.shape
    act = jnp.zeros((x.shape[0], out_f, in_f), jnp.float32)
    for k in range(grid_size - 1):
        mask = (xc >= float(knots[k])) & (xc < float(knots[k + 1]))
        t = (xc - float(knots[k])) / (float(knots[k + 1]) - float(knots[k]))
        interp = ((1.0 - t)[:, None, :] * coefficients[None, :, :, k]
                  + t[:, None, :] * coefficients[None, :, :, k + 1])
        act = jnp.where(mask[:, None, :], interp, act)  # intervals are disjoint
    return jnp.sum(act * base_weight[None, :, :], axis=-1)


if __name__ == "__main__":
    batch, in_features, out_features, grid_size = 8, 16, 32, 5

    key = jax.random.PRNGKey(0)
    k_x, k_c, k_w = jax.random.split(key, 3)

    # Deterministic synthetic parameters (shapes from the module __init__):
    #   - one (grid_size,) coefficient vector per (out_features * in_features) edge
    #   - base_weight ~ N(0,1) * 0.1 with shape (out_features, in_features)
    coefficients = jax.random.normal(
        k_c, (out_features, in_features, grid_size), dtype=jnp.float32)
    base_weight = jax.random.normal(
        k_w, (out_features, in_features), dtype=jnp.float32) * 0.1
    x = jax.random.normal(k_x, (batch, in_features), dtype=jnp.float32)

    ref = _reference(x, coefficients, base_weight, grid_size)

    # Default path: fully VMEM-resident cw, batch-only grid.
    out = kan_layer_forward(x, coefficients, base_weight, grid_size)
    out = jax.block_until_ready(out)
    assert out.shape == (batch, out_features)
    # Tolerance accounts for the bf16 MXU operands (f32 accumulation).
    np.testing.assert_allclose(np.asarray(out), np.asarray(ref),
                               atol=5e-3, rtol=5e-3)

    # Tiled-cw fallback path (what large layers / v7x would use) -- same result.
    out_t = kan_layer_forward(x, coefficients, base_weight, grid_size,
                              force_tiled=True)
    out_t = jax.block_until_ready(out_t)
    np.testing.assert_allclose(np.asarray(out_t), np.asarray(ref),
                               atol=5e-3, rtol=5e-3)

    print("KERNEL_OK")
</pallas_src>

<mosaic_0001>
module attributes {stable_mosaic.version = 11 : i64} {
  func.func @_kan_kernel(%arg0: i32, %arg1: memref<8x128xf32, #tpu.memory_space<vmem>>, %arg2: memref<640x128xbf16, #tpu.memory_space<vmem>>, %arg3: memref<8x128xf32, #tpu.memory_space<vmem>>) attributes {dimension_semantics = [#tpu.dimension_semantics<parallel>], iteration_bounds = array<i64: 1>, scalar_prefetch = 0 : i64, scratch_operands = 0 : i64, tpu.core_type = #tpu.core_type<tc>, window_params = [{transform_indices = @transform_0, window_bounds = array<i64: 8, 128>}, {pipeline_mode = #tpu.pipeline_mode<synchronous>, transform_indices = @transform_1, window_bounds = array<i64: 640, 128>}, {transform_indices = @transform_2, window_bounds = array<i64: 8, 128>}]} {
    %c0 = arith.constant 0 : index
    %c0_0 = arith.constant 0 : index
    %0 = vector.load %arg1[%c0, %c0_0] : memref<8x128xf32, #tpu.memory_space<vmem>>, vector<8x128xf32>
    %cst = arith.constant -1.000000e+00 : f32
    %cst_1 = arith.constant 1.000000e+00 : f32
    %1 = vector.broadcast %cst : f32 to vector<8x128xf32>
    %2 = arith.maximumf %1, %0 : vector<8x128xf32>
    %3 = vector.broadcast %cst_1 : f32 to vector<8x128xf32>
    %4 = arith.minimumf %3, %2 : vector<8x128xf32>
    %cst_2 = arith.constant 1.000000e+00 : f32
    %5 = vector.broadcast %cst_2 : f32 to vector<8x128xf32>
    %6 = arith.cmpf olt, %4, %5 : vector<8x128xf32>
    %cst_3 = arith.constant 1.500000e+00 : f32
    %7 = vector.broadcast %cst_3 : f32 to vector<8x128xf32>
    %8 = arith.select %6, %4, %7 : vector<8x128xi1>, vector<8x128xf32>
    %cst_4 = arith.constant -1.000000e+00 : f32
    %9 = vector.broadcast %cst_4 : f32 to vector<8x128xf32>
    %10 = arith.subf %8, %9 : vector<8x128xf32>
    %11 = math.absf %10 : vector<8x128xf32>
    %cst_5 = arith.constant 2.000000e+00 : f32
    %12 = vector.broadcast %cst_5 : f32 to vector<8x128xf32>
    %13 = arith.mulf %11, %12 : vector<8x128xf32>
    %cst_6 = arith.constant 1.000000e+00 : f32
    %14 = vector.broadcast %cst_6 : f32 to vector<8x128xf32>
    %15 = arith.subf %14, %13 : vector<8x128xf32>
    %cst_7 = arith.constant 0.000000e+00 : f32
    %16 = vector.broadcast %cst_7 : f32 to vector<8x128xf32>
    %17 = arith.maximumf %16, %15 : vector<8x128xf32>
    %18 = arith.truncf %17 : vector<8x128xf32> to vector<8x128xbf16>
    %cst_8 = arith.constant -5.000000e-01 : f32
    %19 = vector.broadcast %cst_8 : f32 to vector<8x128xf32>
    %20 = arith.subf %8, %19 : vector<8x128xf32>
    %21 = math.absf %20 : vector<8x128xf32>
    %cst_9 = arith.constant 2.000000e+00 : f32
    %22 = vector.broadcast %cst_9 : f32 to vector<8x128xf32>
    %23 = arith.mulf %21, %22 : vector<8x128xf32>
    %cst_10 = arith.constant 1.000000e+00 : f32
    %24 = vector.broadcast %cst_10 : f32 to vector<8x128xf32>
    %25 = arith.subf %24, %23 : vector<8x128xf32>
    %cst_11 = arith.constant 0.000000e+00 : f32
    %26 = vector.broadcast %cst_11 : f32 to vector<8x128xf32>
    %27 = arith.maximumf %26, %25 : vector<8x128xf32>
    %28 = arith.truncf %27 : vector<8x128xf32> to vector<8x128xbf16>
    %cst_12 = arith.constant 0.000000e+00 : f32
    %29 = vector.broadcast %cst_12 : f32 to vector<8x128xf32>
    %30 = arith.subf %8, %29 : vector<8x128xf32>
    %31 = math.absf %30 : vector<8x128xf32>
    %cst_13 = arith.constant 2.000000e+00 : f32
    %32 = vector.broadcast %cst_13 : f32 to vector<8x128xf32>
    %33 = arith.mulf %31, %32 : vector<8x128xf32>
    %cst_14 = arith.constant 1.000000e+00 : f32
    %34 = vector.broadcast %cst_14 : f32 to vector<8x128xf32>
    %35 = arith.subf %34, %33 : vector<8x128xf32>
    %cst_15 = arith.constant 0.000000e+00 : f32
    %36 = vector.broadcast %cst_15 : f32 to vector<8x128xf32>
    %37 = arith.maximumf %36, %35 : vector<8x128xf32>
    %38 = arith.truncf %37 : vector<8x128xf32> to vector<8x128xbf16>
    %cst_16 = arith.constant 5.000000e-01 : f32
    %39 = vector.broadcast %cst_16 : f32 to vector<8x128xf32>
    %40 = arith.subf %8, %39 : vector<8x128xf32>
    %41 = math.absf %40 : vector<8x128xf32>
    %cst_17 = arith.constant 2.000000e+00 : f32
    %42 = vector.broadcast %cst_17 : f32 to vector<8x128xf32>
    %43 = arith.mulf %41, %42 : vector<8x128xf32>
    %cst_18 = arith.constant 1.000000e+00 : f32
    %44 = vector.broadcast %cst_18 : f32 to vector<8x128xf32>
    %45 = arith.subf %44, %43 : vector<8x128xf32>
    %cst_19 = arith.constant 0.000000e+00 : f32
    %46 = vector.broadcast %cst_19 : f32 to vector<8x128xf32>
    %47 = arith.maximumf %46, %45 : vector<8x128xf32>
    %48 = arith.truncf %47 : vector<8x128xf32> to vector<8x128xbf16>
    %cst_20 = arith.constant 1.000000e+00 : f32
    %49 = vector.broadcast %cst_20 : f32 to vector<8x128xf32>
    %50 = arith.subf %8, %49 : vector<8x128xf32>
    %51 = math.absf %50 : vector<8x128xf32>
    %cst_21 = arith.constant 2.000000e+00 : f32
    %52 = vector.broadcast %cst_21 : f32 to vector<8x128xf32>
    %53 = arith.mulf %51, %52 : vector<8x128xf32>
    %cst_22 = arith.constant 1.000000e+00 : f32
    %54 = vector.broadcast %cst_22 : f32 to vector<8x128xf32>
    %55 = arith.subf %54, %53 : vector<8x128xf32>
    %cst_23 = arith.constant 0.000000e+00 : f32
    %56 = vector.broadcast %cst_23 : f32 to vector<8x128xf32>
    %57 = arith.maximumf %56, %55 : vector<8x128xf32>
    %58 = arith.truncf %57 : vector<8x128xf32> to vector<8x128xbf16>
    %59 = tpu.concatenate %18, %28, %38, %48, %58 in 1 : vector<8x128xbf16>, vector<8x128xbf16>, vector<8x128xbf16>, vector<8x128xbf16>, vector<8x128xbf16> -> vector<8x640xbf16>
    %c0_24 = arith.constant 0 : index
    %c0_25 = arith.constant 0 : index
    %60 = vector.load %arg2[%c0_24, %c0_25] : memref<640x128xbf16, #tpu.memory_space<vmem>>, vector<640x128xbf16>
    %cst_26 = arith.constant dense<0.000000e+00> : vector<8x128xf32>
    %61 = tpu.matmul %59, %60, %cst_26 {dimension_numbers = #tpu.dot_dimension_numbers<[1], [0], [0], [1], [0, 0, 1, 1], [], []>} : vector<8x640xbf16>, vector<640x128xbf16>, vector<8x128xf32> -> vector<8x128xf32>
    %c0_27 = arith.constant 0 : index
    %c0_28 = arith.constant 0 : index
    %62 = vector.load %arg3[%c0_27, %c0_28] : memref<8x128xf32, #tpu.memory_space<vmem>>, vector<8x128xf32>
    tpu.vector_store %arg3[%c0_27, %c0_28], %61 {strides = array<i32>} : memref<8x128xf32, #tpu.memory_space<vmem>>, vector<8x128xf32>,
    return
  }
  func.func @transform_0(%arg0: i32) -> (i32, i32) {
    %c0_i32 = arith.constant 0 : i32
    %c0_i32_0 = arith.constant 0 : i32
    return %arg0, %c0_i32 : i32, i32
  }
  func.func @transform_1(%arg0: i32) -> (i32, i32) {
    %c0_i32 = arith.constant 0 : i32
    %c0_i32_0 = arith.constant 0 : i32
    %c0_i32_1 = arith.constant 0 : i32
    return %c0_i32, %c0_i32_0 : i32, i32
  }
  func.func @transform_2(%arg0: i32) -> (i32, i32) {
    %c0_i32 = arith.constant 0 : i32
    %c0_i32_0 = arith.constant 0 : i32
    return %arg0, %c0_i32 : i32, i32
  }
}

</mosaic_0001>

<llo_original>
// kernel: tpu_custom_call.1
$region0: #{tpu_custom_call.1}
  #allocation0 [shape = 'u32[]', space=smem, size = 0x4, offset = 0x4, fixed_abs, tag = 'smem constant byte address 0x4 - core index']
  #allocation1 [shape = 'u32[144,128]{1,0:T(1,128)}', space=vmem, size = 0x12000, scoped, tag = 'internal scratch']
  %s0 = inlined_call_operand.hbm [shape: f32[8,128], index: 0, kind: input, shape index: {}]
  %s1 = inlined_call_operand.hbm [shape: bf16[640,128], index: 1, kind: input, shape index: {}]
  %s2 = inlined_call_operand.hbm [shape: f32[8,128], index: 2, kind: output, shape index: {}]
  %s3 = sld [smem:[#allocation0]]
  $region26: #{tpu_custom_call.1} parent=0
    _
  %s5 = ssub.s32 1, %s3
  %s6 = scalar_select 0, %s5, %s3
  $region1: #{tpu_custom_call.1} parent=0
    #allocation2 [shape = 'u8[4096]{0}', space=vmem, size = 0x1000, scoped, tag = 'input window, operand 0, single buffered']
    #allocation3 [shape = 's32[1]{0}', space=sflag, size = 0x4, scoped, tag = 'scoped memory for tpu_custom_call.1']
    #allocation4 [shape = 's32[1]{0}', space=sflag, size = 0x4, scoped, tag = 'scoped memory for tpu_custom_call.1']
    #allocation5 [shape = 'u8[163840]{0}', space=vmem, size = 0x28000, scoped, tag = 'input window, operand 1, single buffered']
    #allocation6 [shape = 's32[1]{0}', space=sflag, size = 0x4, scoped, tag = 'scoped memory for tpu_custom_call.1']
    #allocation7 [shape = 'u8[4096]{0}', space=vmem, size = 0x1000, scoped, tag = 'output window, operand 0, single buffered']
    %7 = vsyncpa [#allocation3], 0
    %8 = vsyncpa [#allocation6], 0
    %9 = vsyncpa [#allocation4], 0
    // Predicated region
    $region2: #{tpu_custom_call.1} parent=1 // pred_check
      _
    $region3: #{tpu_custom_call.1} parent=1 // pred_check_branch
      %11 = sbr.rel (0) target = $region5
    $region4: #{tpu_custom_call.1} parent=1 // pred_region
      %s13 = ssub.s32 128, 128
      %14 = vsyncadd [#allocation3], %s13
      %s16 = sshll.u32 [#allocation2], 4
      %s17 = int_to_ptr.vmem [resolvable:$true] %s16
      %19 = dma.hbm_to_vmem [thread:$0]  %s0, 128, %s17, [#allocation3]
    $region5: #{tpu_custom_call.1} parent=1 // pred_fallthru
      _
    // Predicated region
    $region6: #{tpu_custom_call.1} parent=1 // pred_check
      _
    $region7: #{tpu_custom_call.1} parent=1 // pred_check_branch
      %21 = sbr.rel (0) target = $region9
    $region8: #{tpu_custom_call.1} parent=1 // pred_region
      %s23 = ssub.s32 5120, 5120
      %24 = vsyncadd [#allocation6], %s23
      %s25 = sshll.u32 [#allocation5], 4
      %s26 = int_to_ptr.vmem [resolvable:$true] %s25
      %31 = dma.hbm_to_vmem [thread:$0]  %s1, 5120, %s26, [#allocation6], 64, 64, 4
    $region9: #{tpu_custom_call.1} parent=1 // pred_fallthru
      _
    // Predicated region
    $region10: #{tpu_custom_call.1} parent=1 // pred_check
      _
    $region11: #{tpu_custom_call.1} parent=1 // pred_check_branch
      %33 = sbr.rel (0) target = $region13
    $region12: #{tpu_custom_call.1} parent=1 // pred_region
      %34 = dma.done [#allocation3], 128
    $region13: #{tpu_custom_call.1} parent=1 // pred_fallthru
      _
    // Predicated region
    $region14: #{tpu_custom_call.1} parent=1 // pred_check
      _
    $region15: #{tpu_custom_call.1} parent=1 // pred_check_branch
      %36 = sbr.rel (0) target = $region17
    $region16: #{tpu_custom_call.1} parent=1 // pred_region
      %37 = dma.done [#allocation6], 5120
    $region17: #{tpu_custom_call.1} parent=1 // pred_fallthru
      _
    %v39 = vld [vmem:[#allocation2] sm:$0xff]
    %v40 = vmax.f32 %v39, -1.0
    %v41 = vmin.f32 %v40, 1.0
    %vm42 = vcmp.lt.f32.partialorder %v41, 1.0
    %v43 = vsel %vm42, %v41, 1.5
    %v44 = vsub.f32 %v43, -1.0
    %v45 = vand.u32 2147483647, %v44
    %v46 = vmul.f32 %v45, 2.0
    %v47 = vsub.f32 1.0, %v46
    %v48 = vmax.f32 %v47, 0.0
    %v49 = vpack.c.bf16 %v48, %v48
    %v50 = vsub.f32 %v43, -0.5
    %v51 = vand.u32 2147483647, %v50
    %v52 = vmul.f32 %v51, 2.0
    %v53 = vsub.f32 1.0, %v52
    %v54 = vmax.f32 %v53, 0.0
    %v55 = vpack.c.bf16 %v54, %v54
    %v56 = vand.u32 2147483647, %v43
    %v57 = vmul.f32 %v56, 2.0
    %v58 = vsub.f32 1.0, %v57
    %v59 = vmax.f32 %v58, 0.0
    %v60 = vpack.c.bf16 %v59, %v59
    %v61 = vsub.f32 %v43, 0.5
    %v62 = vand.u32 2147483647, %v61
    %v63 = vmul.f32 %v62, 2.0
    %v64 = vsub.f32 1.0, %v63
    %v65 = vmax.f32 %v64, 0.0
    %v66 = vpack.c.bf16 %v65, %v65
    %v67 = vsub.f32 %v43, 1.0
    %v68 = vand.u32 2147483647, %v67
    %v69 = vmul.f32 %v68, 2.0
    %v70 = vsub.f32 1.0, %v69
    %v71 = vmax.f32 %v70, 0.0
    %v72 = vpack.c.bf16 %v71, %v71
    %v73 = vld [vmem:[#allocation5] sm:$0xf]
    %v74 = vld [vmem:[#allocation5 + $0x4] sm:$0xf]
    %v75 = vld [vmem:[#allocation5 + $0x8] sm:$0xf]
    %v76 = vld [vmem:[#allocation5 + $0xc] sm:$0xf]
    %v77 = vld [vmem:[#allocation5 + $0x10] sm:$0xf]
    %v78 = vld [vmem:[#allocation5 + $0x14] sm:$0xf]
    %v79 = vld [vmem:[#allocation5 + $0x18] sm:$0xf]
    %v80 = vld [vmem:[#allocation5 + $0x1c] sm:$0xf]
    %v81 = vld [vmem:[#allocation5 + $0x20] sm:$0xf]
    %v82 = vld [vmem:[#allocation5 + $0x24] sm:$0xf]
    %v83 = vld [vmem:[#allocation5 + $0x28] sm:$0xf]
    %v84 = vld [vmem:[#allocation5 + $0x2c] sm:$0xf]
    %v85 = vld [vmem:[#allocation5 + $0x30] sm:$0xf]
    %v86 = vld [vmem:[#allocation5 + $0x34] sm:$0xf]
    %v87 = vld [vmem:[#allocation5 + $0x38] sm:$0xf]
    %v88 = vld [vmem:[#allocation5 + $0x3c] sm:$0xf]
    %v89 = vld [vmem:[#allocation5 + $0x40] sm:$0xf]
    %v90 = vld [vmem:[#allocation5 + $0x44] sm:$0xf]
    %v91 = vld [vmem:[#allocation5 + $0x48] sm:$0xf]
    %v92 = vld [vmem:[#allocation5 + $0x4c] sm:$0xf]
    %v93 = vld [vmem:[#allocation5 + $0x50] sm:$0xf]
    %v94 = vld [vmem:[#allocation5 + $0x54] sm:$0xf]
    %v95 = vld [vmem:[#allocation5 + $0x58] sm:$0xf]
    %v96 = vld [vmem:[#allocation5 + $0x5c] sm:$0xf]
    %v97 = vld [vmem:[#allocation5 + $0x60] sm:$0xf]
    %v98 = vld [vmem:[#allocation5 + $0x64] sm:$0xf]
    %v99 = vld [vmem:[#allocation5 + $0x68] sm:$0xf]
    %v100 = vld [vmem:[#allocation5 + $0x6c] sm:$0xf]
    %v101 = vld [vmem:[#allocation5 + $0x70] sm:$0xf]
    %v102 = vld [vmem:[#allocation5 + $0x74] sm:$0xf]
    %v103 = vld [vmem:[#allocation5 + $0x78] sm:$0xf]
    %v104 = vld [vmem:[#allocation5 + $0x7c] sm:$0xf]
    %v105 = vld [vmem:[#allocation5 + $0x80] sm:$0xf]
    %v106 = vld [vmem:[#allocation5 + $0x84] sm:$0xf]
    %v107 = vld [vmem:[#allocation5 + $0x88] sm:$0xf]
    %v108 = vld [vmem:[#allocation5 + $0x8c] sm:$0xf]
    %v109 = vld [vmem:[#allocation5 + $0x90] sm:$0xf]
    %v110 = vld [vmem:[#allocation5 + $0x94] sm:$0xf]
    %v111 = vld [vmem:[#allocation5 + $0x98] sm:$0xf]
    %v112 = vld [vmem:[#allocation5 + $0x9c] sm:$0xf]
    %v113 = vld [vmem:[#allocation5 + $0xa0] sm:$0xf]
    %v114 = vld [vmem:[#allocation5 + $0xa4] sm:$0xf]
    %v115 = vld [vmem:[#allocation5 + $0xa8] sm:$0xf]
    %v116 = vld [vmem:[#allocation5 + $0xac] sm:$0xf]
    %v117 = vld [vmem:[#allocation5 + $0xb0] sm:$0xf]
    %v118 = vld [vmem:[#allocation5 + $0xb4] sm:$0xf]
    %v119 = vld [vmem:[#allocation5 + $0xb8] sm:$0xf]
    %v120 = vld [vmem:[#allocation5 + $0xbc] sm:$0xf]
    %v121 = vld [vmem:[#allocation5 + $0xc0] sm:$0xf]
    %v122 = vld [vmem:[#allocation5 + $0xc4] sm:$0xf]
    %v123 = vld [vmem:[#allocation5 + $0xc8] sm:$0xf]
    %v124 = vld [vmem:[#allocation5 + $0xcc] sm:$0xf]
    %v125 = vld [vmem:[#allocation5 + $0xd0] sm:$0xf]
    %v126 = vld [vmem:[#allocation5 + $0xd4] sm:$0xf]
    %v127 = vld [vmem:[#allocation5 + $0xd8] sm:$0xf]
    %v128 = vld [vmem:[#allocation5 + $0xdc] sm:$0xf]
    %v129 = vld [vmem:[#allocation5 + $0xe0] sm:$0xf]
    %v130 = vld [vmem:[#allocation5 + $0xe4] sm:$0xf]
    %v131 = vld [vmem:[#allocation5 + $0xe8] sm:$0xf]
    %v132 = vld [vmem:[#allocation5 + $0xec] sm:$0xf]
    %v133 = vld [vmem:[#allocation5 + $0xf0] sm:$0xf]
    %v134 = vld [vmem:[#allocation5 + $0xf4] sm:$0xf]
    %v135 = vld [vmem:[#allocation5 + $0xf8] sm:$0xf]
    %v136 = vld [vmem:[#allocation5 + $0xfc] sm:$0xf]
    %v137 = vld [vmem:[#allocation5 + $0x100] sm:$0xf]
    %v138 = vld [vmem:[#allocation5 + $0x104] sm:$0xf]
    %v139 = vld [vmem:[#allocation5 + $0x108] sm:$0xf]
    %v140 = vld [vmem:[#allocation5 + $0x10c] sm:$0xf]
    %v141 = vld [vmem:[#allocation5 + $0x110] sm:$0xf]
    %v142 = vld [vmem:[#allocation5 + $0x114] sm:$0xf]
    %v143 = vld [vmem:[#allocation5 + $0x118] sm:$0xf]
    %v144 = vld [vmem:[#allocation5 + $0x11c] sm:$0xf]
    %v145 = vld [vmem:[#allocation5 + $0x120] sm:$0xf]
    %v146 = vld [vmem:[#allocation5 + $0x124] sm:$0xf]
    %v147 = vld [vmem:[#allocation5 + $0x128] sm:$0xf]
    %v148 = vld [vmem:[#allocation5 + $0x12c] sm:$0xf]
    %v149 = vld [vmem:[#allocation5 + $0x130] sm:$0xf]
    %v150 = vld [vmem:[#allocation5 + $0x134] sm:$0xf]
    %v151 = vld [vmem:[#allocation5 + $0x138] sm:$0xf]
    %v152 = vld [vmem:[#allocation5 + $0x13c] sm:$0xf]
    %v233 = vunpack.c.l.b16 %v73
    %v234 = vunpack.c.l.b16 %v74
    %v235 = vunpack.c.l.b16 %v75
    %v236 = vunpack.c.l.b16 %v76
    %v237 = vunpack.c.l.b16 %v77
    %v238 = vunpack.c.l.b16 %v78
    %v239 = vunpack.c.l.b16 %v79
    %v240 = vunpack.c.l.b16 %v80
    %v241 = vunpack.c.l.b16 %v81
    %v242 = vunpack.c.l.b16 %v82
    %v243 = vunpack.c.l.b16 %v83
    %v244 = vunpack.c.l.b16 %v84
    %v245 = vunpack.c.l.b16 %v85
    %v246 = vunpack.c.l.b16 %v86
    %v247 = vunpack.c.l.b16 %v87
    %v248 = vunpack.c.l.b16 %v88
    %v249 = vunpack.c.l.b16 %v89
    %v250 = vunpack.c.l.b16 %v90
    %v251 = vunpack.c.l.b16 %v91
    %v252 = vunpack.c.l.b16 %v92
    %v253 = vunpack.c.l.b16 %v93
    %v254 = vunpack.c.l.b16 %v94
    %v255 = vunpack.c.l.b16 %v95
    %v256 = vunpack.c.l.b16 %v96
    %v257 = vunpack.c.l.b16 %v97
    %v258 = vunpack.c.l.b16 %v98
    %v259 = vunpack.c.l.b16 %v99
    %v260 = vunpack.c.l.b16 %v100
    %v261 = vunpack.c.l.b16 %v101
    %v262 = vunpack.c.l.b16 %v102
    %v263 = vunpack.c.l.b16 %v103
    %v264 = vunpack.c.l.b16 %v104
    %v265 = vunpack.c.l.b16 %v105
    %v266 = vunpack.c.l.b16 %v106
    %v267 = vunpack.c.l.b16 %v107
    %v268 = vunpack.c.l.b16 %v108
    %v269 = vunpack.c.l.b16 %v109
    %v270 = vunpack.c.l.b16 %v110
    %v271 = vunpack.c.l.b16 %v111
    %v272 = vunpack.c.l.b16 %v112
    %v273 = vunpack.c.l.b16 %v113
    %v274 = vunpack.c.l.b16 %v114
    %v275 = vunpack.c.l.b16 %v115
    %v276 = vunpack.c.l.b16 %v116
    %v277 = vunpack.c.l.b16 %v117
    %v278 = vunpack.c.l.b16 %v118
    %v279 = vunpack.c.l.b16 %v119
    %v280 = vunpack.c.l.b16 %v120
    %v281 = vunpack.c.l.b16 %v121
    %v282 = vunpack.c.l.b16 %v122
    %v283 = vunpack.c.l.b16 %v123
    %v284 = vunpack.c.l.b16 %v124
    %v285 = vunpack.c.l.b16 %v125
    %v286 = vunpack.c.l.b16 %v126
    %v287 = vunpack.c.l.b16 %v127
    %v288 = vunpack.c.l.b16 %v128
    %v289 = vunpack.c.l.b16 %v129
    %v290 = vunpack.c.l.b16 %v130
    %v291 = vunpack.c.l.b16 %v131
    %v292 = vunpack.c.l.b16 %v132
    %v293 = vunpack.c.l.b16 %v133
    %v294 = vunpack.c.l.b16 %v134
    %v295 = vunpack.c.l.b16 %v135
    %v296 = vunpack.c.l.b16 %v136
    %v297 = vunpack.c.l.b16 %v137
    %v298 = vunpack.c.l.b16 %v138
    %v299 = vunpack.c.l.b16 %v139
    %v300 = vunpack.c.l.b16 %v140
    %v301 = vunpack.c.l.b16 %v141
    %v302 = vunpack.c.l.b16 %v142
    %v303 = vunpack.c.l.b16 %v143
    %v304 = vunpack.c.l.b16 %v144
    %v305 = vunpack.c.l.b16 %v145
    %v306 = vunpack.c.l.b16 %v146
    %v307 = vunpack.c.l.b16 %v147
    %v308 = vunpack.c.l.b16 %v148
    %v309 = vunpack.c.l.b16 %v149
    %v310 = vunpack.c.l.b16 %v150
    %v311 = vunpack.c.l.b16 %v151
    %v312 = vunpack.c.l.b16 %v152
    %v313 = vpack.c.b16 %v234, %v233
    %v314 = vpack.c.b16 %v236, %v235
    %v315 = vpack.c.b16 %v238, %v237
    %v316 = vpack.c.b16 %v240, %v239
    %v317 = vpack.c.b16 %v242, %v241
    %v318 = vpack.c.b16 %v244, %v243
    %v319 = vpack.c.b16 %v246, %v245
    %v320 = vpack.c.b16 %v248, %v247
    %v321 = vpack.c.b16 %v250, %v249
    %v322 = vpack.c.b16 %v252, %v251
    %v323 = vpack.c.b16 %v254, %v253
    %v324 = vpack.c.b16 %v256, %v255
    %v325 = vpack.c.b16 %v258, %v257
    %v326 = vpack.c.b16 %v260, %v259
    %v327 = vpack.c.b16 %v262, %v261
    %v328 = vpack.c.b16 %v264, %v263
    %v329 = vpack.c.b16 %v266, %v265
    %v330 = vpack.c.b16 %v268, %v267
    %v331 = vpack.c.b16 %v270, %v269
    %v332 = vpack.c.b16 %v272, %v271
    %v333 = vpack.c.b16 %v274, %v273
    %v334 = vpack.c.b16 %v276, %v275
    %v335 = vpack.c.b16 %v278, %v277
    %v336 = vpack.c.b16 %v280, %v279
    %v337 = vpack.c.b16 %v282, %v281
    %v338 = vpack.c.b16 %v284, %v283
    %v339 = vpack.c.b16 %v286, %v285
    %v340 = vpack.c.b16 %v288, %v287
    %v341 = vpack.c.b16 %v290, %v289
    %v342 = vpack.c.b16 %v292, %v291
    %v343 = vpack.c.b16 %v294, %v293
    %v344 = vpack.c.b16 %v296, %v295
    %v345 = vpack.c.b16 %v298, %v297
    %v346 = vpack.c.b16 %v300, %v299
    %v347 = vpack.c.b16 %v302, %v301
    %v348 = vpack.c.b16 %v304, %v303
    %v349 = vpack.c.b16 %v306, %v305
    %v350 = vpack.c.b16 %v308, %v307
    %v351 = vpack.c.b16 %v310, %v309
    %v352 = vpack.c.b16 %v312, %v311
    %393 = vmatprep.subr.bf16.mxu0 0
    %394 = vmatpush1.bf16.msra.mxu0 %v313
    %395 = vmatprep.subr.bf16.mxu0 0
    %396 = vmatpush1.bf16.msra.mxu0 %v314
    %397 = vmatprep.subr.bf16.mxu0 0
    %398 = vmatpush1.bf16.msra.mxu0 %v315
    %399 = vmatprep.subr.bf16.mxu0 0
    %400 = vmatpush1.bf16.msra.mxu0 %v316
    %401 = vmatprep.subr.bf16.mxu0 0
    %402 = vmatpush1.bf16.msra.mxu0 %v317
    %403 = vmatprep.subr.bf16.mxu0 0
    %404 = vmatpush1.bf16.msra.mxu0 %v318
    %405 = vmatprep.subr.bf16.mxu0 0
    %406 = vmatpush1.bf16.msra.mxu0 %v319
    %407 = vmatprep.subr.bf16.mxu0 0
    %408 = vmatpush1.bf16.msra.mxu0 %v320
    %409 = vmatprep.subr.bf16.mxu0 0
    %410 = vmatpush1.bf16.msra.mxu0 %v321
    %411 = vmatprep.subr.bf16.mxu0 0
    %412 = vmatpush1.bf16.msra.mxu0 %v322
    %413 = vmatprep.subr.bf16.mxu0 0
    %414 = vmatpush1.bf16.msra.mxu0 %v323
    %415 = vmatprep.subr.bf16.mxu0 0
    %416 = vmatpush1.bf16.msra.mxu0 %v324
    %417 = vmatprep.subr.bf16.mxu0 0
    %418 = vmatpush1.bf16.msra.mxu0 %v325
    %419 = vmatprep.subr.bf16.mxu0 0
    %420 = vmatpush1.bf16.msra.mxu0 %v326
    %421 = vmatprep.subr.bf16.mxu0 0
    %422 = vmatpush1.bf16.msra.mxu0 %v327
    %423 = vmatprep.subr.bf16.mxu0 0
    %424 = vmatpush1.bf16.msra.mxu0 %v328
    %425 = vmatprep.mubr.bf16.mxu0 %v55
    %426 = vmatmul.mubr.bf16.gmra.mrb[0].mxu0 %v49
    %v427 = vpop.f32.mrb[0].mxu0
    %v428 = vadd.f32 0.0, %v427
    %v429 = vpop.f32.mrb[0].mxu0
    %v430 = vpop.f32.mrb[0].mxu0
    %v431 = vpop.f32.mrb[0].mxu0
    %432 = vdwg.mxu0
    %433 = vmatprep.subr.bf16.mxu0 0
    %434 = vmatpush1.bf16.msra.mxu0 %v329
    %435 = vmatprep.subr.bf16.mxu0 0
    %436 = vmatpush1.bf16.msra.mxu0 %v330
    %437 = vmatprep.subr.bf16.mxu0 0
    %438 = vmatpush1.bf16.msra.mxu0 %v331
    %439 = vmatprep.subr.bf16.mxu0 0
    %440 = vmatpush1.bf16.msra.mxu0 %v332
    %441 = vmatprep.subr.bf16.mxu0 0
    %442 = vmatpush1.bf16.msra.mxu0 %v333
    %443 = vmatprep.subr.bf16.mxu0 0
    %444 = vmatpush1.bf16.msra.mxu0 %v334
    %445 = vmatprep.subr.bf16.mxu0 0
    %446 = vmatpush1.bf16.msra.mxu0 %v335
    %447 = vmatprep.subr.bf16.mxu0 0
    %448 = vmatpush1.bf16.msra.mxu0 %v336
    %449 = vmatprep.subr.bf16.mxu0 0
    %450 = vmatpush1.bf16.msra.mxu0 %v337
    %451 = vmatprep.subr.bf16.mxu0 0
    %452 = vmatpush1.bf16.msra.mxu0 %v338
    %453 = vmatprep.subr.bf16.mxu0 0
    %454 = vmatpush1.bf16.msra.mxu0 %v339
    %455 = vmatprep.subr.bf16.mxu0 0
    %456 = vmatpush1.bf16.msra.mxu0 %v340
    %457 = vmatprep.subr.bf16.mxu0 0
    %458 = vmatpush1.bf16.msra.mxu0 %v341
    %459 = vmatprep.subr.bf16.mxu0 0
    %460 = vmatpush1.bf16.msra.mxu0 %v342
    %461 = vmatprep.subr.bf16.mxu0 0
    %462 = vmatpush1.bf16.msra.mxu0 %v343
    %463 = vmatprep.subr.bf16.mxu0 0
    %464 = vmatpush1.bf16.msra.mxu0 %v344
    %465 = vmatprep.mubr.bf16.mxu0 %v66
    %466 = vmatmul.mubr.bf16.gmra.mrb[0].mxu0 %v60
    %v467 = vpop.f32.mrb[0].mxu0
    %v468 = vadd.f32 %v428, %v467
    %v469 = vpop.f32.mrb[0].mxu0
    %v470 = vpop.f32.mrb[0].mxu0
    %v471 = vpop.f32.mrb[0].mxu0
    %472 = vdwg.mxu0
    %473 = vmatprep.subr.bf16.mxu0 0
    %474 = vmatpush1.bf16.msra.mxu0 %v345
    %475 = vmatprep.subr.bf16.mxu0 0
    %476 = vmatpush1.bf16.msra.mxu0 %v346
    %477 = vmatprep.subr.bf16.mxu0 0
    %478 = vmatpush1.bf16.msra.mxu0 %v347
    %479 = vmatprep.subr.bf16.mxu0 0
    %480 = vmatpush1.bf16.msra.mxu0 %v348
    %481 = vmatprep.subr.bf16.mxu0 0
    %482 = vmatpush1.bf16.msra.mxu0 %v349
    %483 = vmatprep.subr.bf16.mxu0 0
    %484 = vmatpush1.bf16.msra.mxu0 %v350
    %485 = vmatprep.subr.bf16.mxu0 0
    %486 = vmatpush1.bf16.msra.mxu0 %v351
    %487 = vmatprep.subr.bf16.mxu0 0
    %488 = vmatpush1.bf16.msra.mxu0 %v352
    %489 = vmatprep.subr.bf16.mxu0 0
    %490 = vmatpush1.bf16.msra.mxu0 0
    %491 = vmatprep.subr.bf16.mxu0 0
    %492 = vmatpush1.bf16.msra.mxu0 0
    %493 = vmatprep.subr.bf16.mxu0 0
    %494 = vmatpush1.bf16.msra.mxu0 0
    %495 = vmatprep.subr.bf16.mxu0 0
    %496 = vmatpush1.bf16.msra.mxu0 0
    %497 = vmatprep.subr.bf16.mxu0 0
    %498 = vmatpush1.bf16.msra.mxu0 0
    %499 = vmatprep.subr.bf16.mxu0 0
    %500 = vmatpush1.bf16.msra.mxu0 0
    %501 = vmatprep.subr.bf16.mxu0 0
    %502 = vmatpush1.bf16.msra.mxu0 0
    %503 = vmatprep.subr.bf16.mxu0 0
    %504 = vmatpush1.bf16.msra.mxu0 0
    %505 = vmatprep.mubr.bf16.mxu0 0
    %506 = vmatmul.mubr.bf16.gmra.mrb[0].mxu0 %v72
    %v507 = vpop.f32.mrb[0].mxu0
    %v508 = vadd.f32 %v468, %v507
    %v509 = vpop.f32.mrb[0].mxu0
    %v510 = vpop.f32.mrb[0].mxu0
    %v511 = vpop.f32.mrb[0].mxu0
    %512 = vdwg.mxu0
    %513 = vst [vmem:[#allocation7] sm:$0xff] %v508
    // Predicated region
    $region18: #{tpu_custom_call.1} parent=1 // pred_check
      _
    $region19: #{tpu_custom_call.1} parent=1 // pred_check_branch
      %515 = sbr.rel (0) target = $region21
    $region20: #{tpu_custom_call.1} parent=1 // pred_region
      %s517 = ssub.s32 128, 128
      %518 = vsyncadd [#allocation4], %s517
      %s520 = sshll.u32 [#allocation7], 4
      %s521 = int_to_ptr.vmem [resolvable:$true] %s520
      %523 = dma.vmem_to_hbm [thread:$0]  %s521, 128, %s2, [#allocation4]
    $region21: #{tpu_custom_call.1} parent=1 // pred_fallthru
      _
    // Predicated region
    $region22: #{tpu_custom_call.1} parent=1 // pred_check
      _
    $region23: #{tpu_custom_call.1} parent=1 // pred_check_branch
      %525 = sbr.rel (0) target = $region25
    $region24: #{tpu_custom_call.1} parent=1 // pred_region
      %526 = dma.done [#allocation4], 128
    $region25: #{tpu_custom_call.1} parent=1 // pred_fallthru
      _
    %527 = vsyncpa [#allocation3], 1
    %528 = vsyncpa [#allocation6], 1
    %529 = vsyncpa [#allocation4], 1

</llo_original>
